<compile_context>
chip_gen: v7x
topology: tpu7x:2x2x1
jax: 0.10.0
libtpu: 0.0.40
codegen_flags: <defaults>
</compile_context>

<pallas_src>
import functools
import math

import jax
import jax.numpy as jnp
from jax import lax
from jax.experimental import pallas as pl
from jax.experimental.pallas import tpu as pltpu

_MASK_VALUE = -1e30  # large-negative instead of -inf: exp() underflows to 0, no NaNs


def _round_up(n, m):
    return ((n + m - 1) // m) * m


def _pick_tile(n, pref):
    """Largest multiple of 16 <= pref that evenly divides n (fallback: n)."""
    t = min(pref, n)
    t -= t % 16
    while t >= 16:
        if n % t == 0:
            return t
        t -= 16
    return n


def _heads_per_block(n_head, head_dim):
    """Smallest head group whose lane width (h*head_dim) is a multiple of 128.

    Falls back to all heads (lane width == C == full minor dim), so the
    resulting column blocks are always tiling-compliant.
    """
    for h in range(1, n_head + 1):
        if n_head % h == 0 and (h * head_dim) % 128 == 0:
            return h
    return n_head


# ---------------------------------------------------------------------------
# QKV projection: x @ W_qkv + b, split into q / k / v outputs (no XLA split).
# ---------------------------------------------------------------------------
def _qkv_kernel(x_ref, w_ref, b_ref, q_ref, k_ref, v_ref, *, C):
    # x_ref: (tm, C) f32; w_ref: (C, 3C) bf16 (resident); b_ref: (1, 3C) f32.
    x = x_ref[...].astype(jnp.bfloat16)
    acc = jnp.dot(x, w_ref[...], preferred_element_type=jnp.float32) + b_ref[...]
    q_ref[...] = acc[:, :C].astype(q_ref.dtype)
    k_ref[...] = acc[:, C:2 * C].astype(k_ref.dtype)
    v_ref[...] = acc[:, 2 * C:].astype(v_ref.dtype)


def _qkv_projection(x2, w_bf, b2, *, tm):
    M, C = x2.shape
    qkv_shape = jax.ShapeDtypeStruct((M, C), jnp.bfloat16)
    return pl.pallas_call(
        functools.partial(_qkv_kernel, C=C),
        out_shape=(qkv_shape, qkv_shape, qkv_shape),
        grid_spec=pltpu.PrefetchScalarGridSpec(
            num_scalar_prefetch=0,
            grid=(M // tm,),
            in_specs=[
                pl.BlockSpec((tm, C), lambda i: (i, 0)),        # activations
                pl.BlockSpec((C, 3 * C), lambda i: (0, 0)),     # weight (resident)
                pl.BlockSpec((1, 3 * C), lambda i: (0, 0)),     # bias (resident)
            ],
            out_specs=(
                pl.BlockSpec((tm, C), lambda i: (i, 0)),
                pl.BlockSpec((tm, C), lambda i: (i, 0)),
                pl.BlockSpec((tm, C), lambda i: (i, 0)),
            ),
        ),
        compiler_params=pltpu.CompilerParams(dimension_semantics=("parallel",)),
    )(x2, w_bf, b2)


# ---------------------------------------------------------------------------
# Output projection: y @ W_proj + b.
# ---------------------------------------------------------------------------
def _proj_kernel(x_ref, w_ref, b_ref, o_ref):
    acc = jnp.dot(x_ref[...], w_ref[...], preferred_element_type=jnp.float32)
    o_ref[...] = (acc + b_ref[...]).astype(o_ref.dtype)


def _out_projection(y2, w_bf, b2, *, tm, out_dtype):
    M, C = y2.shape
    return pl.pallas_call(
        _proj_kernel,
        out_shape=jax.ShapeDtypeStruct((M, C), out_dtype),
        grid_spec=pltpu.PrefetchScalarGridSpec(
            num_scalar_prefetch=0,
            grid=(M // tm,),
            in_specs=[
                pl.BlockSpec((tm, C), lambda i: (i, 0)),
                pl.BlockSpec((C, C), lambda i: (0, 0)),
                pl.BlockSpec((1, C), lambda i: (0, 0)),
            ],
            out_specs=pl.BlockSpec((tm, C), lambda i: (i, 0)),
        ),
        compiler_params=pltpu.CompilerParams(dimension_semantics=("parallel",)),
    )(y2, w_bf, b2)


# ---------------------------------------------------------------------------
# Flash-attention kernel: online softmax, block-level causal skip, per-head
# group processed from (M, C) q/k/v slabs, output written in merged layout.
# ---------------------------------------------------------------------------
def _attn_kernel(q_ref, k_ref, v_ref, o_ref, m_sc, l_sc, acc_sc, *,
                 tq, tk, head_dim, h_blk, t_valid):
    # q_ref: (tq, h_blk*hd) bf16 (scale folded into W_q), k/v_ref: (tk, h_blk*hd)
    i = pl.program_id(2)
    j = pl.program_id(3)

    @pl.when(j == 0)
    def _init():
        m_sc[...] = jnp.full(m_sc.shape, _MASK_VALUE, dtype=m_sc.dtype)
        l_sc[...] = jnp.zeros_like(l_sc)
        acc_sc[...] = jnp.zeros_like(acc_sc)

    # Block-level causality: skip KV blocks strictly above the diagonal.
    run = (j * tk) < ((i + 1) * tq)
    # Element masking only needed where the block straddles the diagonal or
    # covers padded (invalid) key positions.
    need_mask = (((j + 1) * tk - 1) > (i * tq)) | (((j + 1) * tk) > t_valid)

    def _update(masked):
        if masked:
            row = i * tq + lax.broadcasted_iota(jnp.int32, (tq, tk), 0)
            col = j * tk + lax.broadcasted_iota(jnp.int32, (tq, tk), 1)
            keep = (row >= col) & (col < t_valid)
        for h in range(h_blk):
            hs = slice(h * head_dim, (h + 1) * head_dim)
            qh = q_ref[:, hs]                         # (tq, hd) bf16, pre-scaled
            kh = k_ref[:, hs]                         # (tk, hd) bf16
            s = lax.dot_general(qh, kh, (((1,), (1,)), ((), ())),
                                preferred_element_type=jnp.float32)   # (tq, tk)
            if masked:
                s = jnp.where(keep, s, _MASK_VALUE)
            m_prev = m_sc[:, h:h + 1]
            m_new = jnp.maximum(m_prev, s.max(axis=-1, keepdims=True))
            alpha = jnp.exp(m_prev - m_new)
            p = jnp.exp(s - m_new)
            l_sc[:, h:h + 1] = alpha * l_sc[:, h:h + 1] + p.sum(axis=-1, keepdims=True)
            acc_sc[:, hs] = alpha * acc_sc[:, hs] + jnp.dot(
                p.astype(v_ref.dtype), v_ref[:, hs],
                preferred_element_type=jnp.float32)
            m_sc[:, h:h + 1] = m_new

    @pl.when(run & need_mask)
    def _():
        _update(True)

    @pl.when(run & jnp.logical_not(need_mask))
    def _():
        _update(False)

    @pl.when(j == pl.num_programs(3) - 1)
    def _finalize():
        inv_l = pl.reciprocal(l_sc[...], approx=True)   # (tq, h_blk), EUP slot
        for h in range(h_blk):
            hs = slice(h * head_dim, (h + 1) * head_dim)
            o_ref[:, hs] = (acc_sc[:, hs] * inv_l[:, h:h + 1]).astype(o_ref.dtype)


def _flash_attention(q2, k2, v2, *, B, T_pad, t_valid, n_head, head_dim, tq, tk):
    M, C = q2.shape
    h_blk = _heads_per_block(n_head, head_dim)
    hhd = h_blk * head_dim
    nbh = n_head // h_blk
    q_blocks = T_pad // tq
    kv_blocks = T_pad // tk

    def q_index(b, hb, i, j):
        return (b * q_blocks + i, hb)

    def kv_index(b, hb, i, j):
        # Clamp so fully-masked (skipped) KV steps reuse the previous block
        # index -> Pallas does not re-DMA it.
        jc = jnp.minimum(j, (i * tq + tq - 1) // tk)
        return (b * kv_blocks + jc, hb)

    kernel = functools.partial(_attn_kernel, tq=tq, tk=tk, head_dim=head_dim,
                               h_blk=h_blk, t_valid=t_valid)
    return pl.pallas_call(
        kernel,
        out_shape=jax.ShapeDtypeStruct((M, C), jnp.bfloat16),
        grid_spec=pltpu.PrefetchScalarGridSpec(
            num_scalar_prefetch=0,
            grid=(B, nbh, q_blocks, kv_blocks),
            in_specs=[
                pl.BlockSpec((tq, hhd), q_index),
                pl.BlockSpec((tk, hhd), kv_index),
                pl.BlockSpec((tk, hhd), kv_index),
            ],
            out_specs=pl.BlockSpec((tq, hhd), q_index),
            scratch_shapes=[
                pltpu.VMEM((tq, h_blk), jnp.float32),   # running max (per head)
                pltpu.VMEM((tq, h_blk), jnp.float32),   # running denom (per head)
                pltpu.VMEM((tq, hhd), jnp.float32),     # output accumulator
            ],
        ),
        compiler_params=pltpu.CompilerParams(
            dimension_semantics=("parallel", "parallel", "parallel", "arbitrary")),
    )(q2, k2, v2)


# ---------------------------------------------------------------------------
# Full CausalSelfAttention forward.
# ---------------------------------------------------------------------------
def causal_self_attention(x, w_attn, b_attn, w_proj, b_proj, *, n_head,
                          tm_pref=256, t_block_pref=512):
    """x: [B, T, C]; w_attn: [C, 3C]; b_attn: [3C]; w_proj: [C, C]; b_proj: [C]."""
    B, T, C = x.shape
    assert C % n_head == 0
    head_dim = C // n_head
    scale = 1.0 / math.sqrt(head_dim)

    # Fold the attention scale into the Q projection (zero runtime cost) and
    # store matmul operands in bf16 (f32 accumulation inside the kernels).
    w_attn_s = jnp.concatenate([w_attn[:, :C] * scale, w_attn[:, C:]], axis=1)
    b_attn_s = jnp.concatenate([b_attn[:C] * scale, b_attn[C:]])
    w_attn_bf = w_attn_s.astype(jnp.bfloat16)
    w_proj_bf = w_proj.astype(jnp.bfloat16)
    b_attn2 = b_attn_s.astype(jnp.float32).reshape(1, 3 * C)
    b_proj2 = b_proj.astype(jnp.float32).reshape(1, C)

    # Pad the sequence so all blocks respect the (16, 128) bf16 tile constraint.
    t_block_pref = max(16, (t_block_pref // 16) * 16)
    tq = min(t_block_pref, _round_up(T, 16))
    tk = tq
    T_pad = _round_up(T, tq)
    if T_pad != T:
        x = jnp.pad(x, ((0, 0), (0, T_pad - T), (0, 0)))
    M = B * T_pad
    x2 = x.reshape(M, C)
    tm = _pick_tile(M, tm_pref)

    # QKV projection -> separate q/k/v (M, C) bf16 buffers (no XLA split/transpose).
    q2, k2, v2 = _qkv_projection(x2, w_attn_bf, b_attn2, tm=tm)

    # Causal flash attention; output already in merged (M, C) layout.
    y2 = _flash_attention(q2, k2, v2, B=B, T_pad=T_pad, t_valid=T,
                          n_head=n_head, head_dim=head_dim, tq=tq, tk=tk)

    # Output projection (head merge is free: y2 is already (B*T, C)).
    out2 = _out_projection(y2, w_proj_bf, b_proj2, tm=tm, out_dtype=x.dtype)
    out = out2.reshape(B, T_pad, C)
    if T_pad != T:
        out = out[:, :T, :]
    return out


# ---------------------------------------------------------------------------
# Pure-JAX reference (mirrors the PyTorch module, f32 end-to-end).
# ---------------------------------------------------------------------------
def attention_reference(x, w_attn, b_attn, w_proj, b_proj, *, n_head):
    B, T, C = x.shape
    hd = C // n_head
    qkv = jnp.einsum("btc,cd->btd", x, w_attn) + b_attn
    q, k, v = jnp.split(qkv, 3, axis=-1)
    q = q.reshape(B, T, n_head, hd).transpose(0, 2, 1, 3)
    k = k.reshape(B, T, n_head, hd).transpose(0, 2, 1, 3)
    v = v.reshape(B, T, n_head, hd).transpose(0, 2, 1, 3)
    att = jnp.einsum("bhqd,bhkd->bhqk", q, k) * (1.0 / math.sqrt(hd))
    mask = jnp.tril(jnp.ones((T, T), dtype=bool))
    att = jnp.where(mask[None, None], att, -jnp.inf)
    att = jax.nn.softmax(att, axis=-1)
    y = jnp.einsum("bhqk,bhkd->bhqd", att, v)
    y = y.transpose(0, 2, 1, 3).reshape(B, T, C)
    return jnp.einsum("btc,cd->btd", y, w_proj) + b_proj


if __name__ == "__main__":
    # Small config: batch=2, seq=8, n_embd=32, n_head=4 -> head_dim=8
    B, T, C, n_head = 2, 8, 32, 4

    key = jax.random.PRNGKey(0)
    kx, k1, k2, k3, k4 = jax.random.split(key, 5)

    x = jax.random.normal(kx, (B, T, C), dtype=jnp.float32)

    # PyTorch nn.Linear weights are [out, in]; the kernel uses [in, out].
    w_attn_pt = jax.random.normal(k1, (3 * C, C), dtype=jnp.float32) * (1.0 / math.sqrt(C))
    b_attn = jax.random.normal(k2, (3 * C,), dtype=jnp.float32) * 0.02
    w_proj_pt = jax.random.normal(k3, (C, C), dtype=jnp.float32) * (1.0 / math.sqrt(C))
    b_proj = jax.random.normal(k4, (C,), dtype=jnp.float32) * 0.02

    w_attn = w_attn_pt.T   # [C, 3C]
    w_proj = w_proj_pt.T   # [C, C]

    out = causal_self_attention(x, w_attn, b_attn, w_proj, b_proj, n_head=n_head)
    out = jax.block_until_ready(out)

    ref = attention_reference(x, w_attn, b_attn, w_proj, b_proj, n_head=n_head)
    assert out.shape == (B, T, C)
    max_err = float(jnp.max(jnp.abs(out - ref)))
    # bf16 MXU operands -> loosened tolerance vs. the f32 reference.
    assert jnp.allclose(out, ref, atol=1e-1, rtol=5e-2), \
        f"mismatch vs reference (max abs err {max_err})"

    print("KERNEL_OK")
</pallas_src>

<mosaic_0001>
module attributes {stable_mosaic.version = 11 : i64} {
  func.func @_qkv_kernel(%arg0: i32, %arg1: memref<32x32xf32, #tpu.memory_space<vmem>>, %arg2: memref<32x96xbf16, #tpu.memory_space<vmem>>, %arg3: memref<1x96xf32, #tpu.memory_space<vmem>>, %arg4: memref<32x32xbf16, #tpu.memory_space<vmem>>, %arg5: memref<32x32xbf16, #tpu.memory_space<vmem>>, %arg6: memref<32x32xbf16, #tpu.memory_space<vmem>>) attributes {dimension_semantics = [#tpu.dimension_semantics<parallel>], iteration_bounds = array<i64: 1>, scalar_prefetch = 0 : i64, scratch_operands = 0 : i64, tpu.core_type = #tpu.core_type<tc>, window_params = [{transform_indices = @transform_0, window_bounds = array<i64: 32, 32>}, {pipeline_mode = #tpu.pipeline_mode<synchronous>, transform_indices = @transform_1, window_bounds = array<i64: 32, 96>}, {pipeline_mode = #tpu.pipeline_mode<synchronous>, transform_indices = @transform_2, window_bounds = array<i64: 1, 96>}, {transform_indices = @transform_3, window_bounds = array<i64: 32, 32>}, {transform_indices = @transform_4, window_bounds = array<i64: 32, 32>}, {transform_indices = @transform_5, window_bounds = array<i64: 32, 32>}]} {
    %c0 = arith.constant 0 : index
    %c0_0 = arith.constant 0 : index
    %0 = vector.load %arg1[%c0, %c0_0] : memref<32x32xf32, #tpu.memory_space<vmem>>, vector<32x32xf32>
    %1 = arith.truncf %0 : vector<32x32xf32> to vector<32x32xbf16>
    %c0_1 = arith.constant 0 : index
    %c0_2 = arith.constant 0 : index
    %2 = vector.load %arg2[%c0_1, %c0_2] : memref<32x96xbf16, #tpu.memory_space<vmem>>, vector<32x96xbf16>
    %cst = arith.constant dense<0.000000e+00> : vector<32x96xf32>
    %3 = tpu.matmul %1, %2, %cst {dimension_numbers = #tpu.dot_dimension_numbers<[1], [0], [0], [1], [0, 0, 1, 1], [], []>} : vector<32x32xbf16>, vector<32x96xbf16>, vector<32x96xf32> -> vector<32x96xf32>
    %c0_3 = arith.constant 0 : index
    %c0_4 = arith.constant 0 : index
    %4 = vector.load %arg3[%c0_3, %c0_4] : memref<1x96xf32, #tpu.memory_space<vmem>>, vector<1x96xf32>
    %5 = vector.broadcast %4 : vector<1x96xf32> to vector<32x96xf32>
    %6 = arith.addf %3, %5 : vector<32x96xf32>
    %7 = vector.extract_strided_slice %6 {offsets = [0, 0], sizes = [32, 32], strides = [1, 1]} : vector<32x96xf32> to vector<32x32xf32>
    %8 = arith.truncf %7 : vector<32x32xf32> to vector<32x32xbf16>
    %c0_5 = arith.constant 0 : index
    %c0_6 = arith.constant 0 : index
    %9 = vector.load %arg4[%c0_5, %c0_6] : memref<32x32xbf16, #tpu.memory_space<vmem>>, vector<32x32xbf16>
    tpu.vector_store %arg4[%c0_5, %c0_6], %8 {strides = array<i32>} : memref<32x32xbf16, #tpu.memory_space<vmem>>, vector<32x32xbf16>,
    %10 = vector.extract_strided_slice %6 {offsets = [0, 32], sizes = [32, 32], strides = [1, 1]} : vector<32x96xf32> to vector<32x32xf32>
    %11 = arith.truncf %10 : vector<32x32xf32> to vector<32x32xbf16>
    %c0_7 = arith.constant 0 : index
    %c0_8 = arith.constant 0 : index
    %12 = vector.load %arg5[%c0_7, %c0_8] : memref<32x32xbf16, #tpu.memory_space<vmem>>, vector<32x32xbf16>
    tpu.vector_store %arg5[%c0_7, %c0_8], %11 {strides = array<i32>} : memref<32x32xbf16, #tpu.memory_space<vmem>>, vector<32x32xbf16>,
    %13 = vector.extract_strided_slice %6 {offsets = [0, 64], sizes = [32, 32], strides = [1, 1]} : vector<32x96xf32> to vector<32x32xf32>
    %14 = arith.truncf %13 : vector<32x32xf32> to vector<32x32xbf16>
    %c0_9 = arith.constant 0 : index
    %c0_10 = arith.constant 0 : index
    %15 = vector.load %arg6[%c0_9, %c0_10] : memref<32x32xbf16, #tpu.memory_space<vmem>>, vector<32x32xbf16>
    tpu.vector_store %arg6[%c0_9, %c0_10], %14 {strides = array<i32>} : memref<32x32xbf16, #tpu.memory_space<vmem>>, vector<32x32xbf16>,
    return
  }
  func.func @transform_0(%arg0: i32) -> (i32, i32) {
    %c0_i32 = arith.constant 0 : i32
    %c0_i32_0 = arith.constant 0 : i32
    return %arg0, %c0_i32 : i32, i32
  }
  func.func @transform_1(%arg0: i32) -> (i32, i32) {
    %c0_i32 = arith.constant 0 : i32
    %c0_i32_0 = arith.constant 0 : i32
    %c0_i32_1 = arith.constant 0 : i32
    return %c0_i32, %c0_i32_0 : i32, i32
  }
  func.func @transform_2(%arg0: i32) -> (i32, i32) {
    %c0_i32 = arith.constant 0 : i32
    %c0_i32_0 = arith.constant 0 : i32
    %c0_i32_1 = arith.constant 0 : i32
    return %c0_i32, %c0_i32_0 : i32, i32
  }
  func.func @transform_3(%arg0: i32) -> (i32, i32) {
    %c0_i32 = arith.constant 0 : i32
    %c0_i32_0 = arith.constant 0 : i32
    return %arg0, %c0_i32 : i32, i32
  }
  func.func @transform_4(%arg0: i32) -> (i32, i32) {
    %c0_i32 = arith.constant 0 : i32
    %c0_i32_0 = arith.constant 0 : i32
    return %arg0, %c0_i32 : i32, i32
  }
  func.func @transform_5(%arg0: i32) -> (i32, i32) {
    %c0_i32 = arith.constant 0 : i32
    %c0_i32_0 = arith.constant 0 : i32
    return %arg0, %c0_i32 : i32, i32
  }
}

</mosaic_0001>

<llo_original>
// kernel: tpu_custom_call.1
$region0: #{tpu_custom_call.1}
  #allocation0 [shape = 'u32[]', space=smem, size = 0x4, offset = 0x4, fixed_abs, tag = 'smem constant byte address 0x4 - core index']
  #allocation1 [shape = 'u32[144,128]{1,0:T(1,128)}', space=vmem, size = 0x12000, scoped, tag = 'internal scratch']
  %s0 = inlined_call_operand.hbm [shape: f32[32,32], index: 0, kind: input, shape index: {}]
  %s1 = inlined_call_operand.hbm [shape: bf16[32,96], index: 1, kind: input, shape index: {}]
  %s2 = inlined_call_operand.vmem [shape: f32[1,96], index: 2, kind: input, shape index: {}]
  %s3 = inlined_call_operand.hbm [shape: bf16[32,32], index: 3, kind: output, shape index: {0}]
  %s4 = inlined_call_operand.hbm [shape: bf16[32,32], index: 4, kind: output, shape index: {1}]
  %s5 = inlined_call_operand.hbm [shape: bf16[32,32], index: 5, kind: output, shape index: {2}]
  %6 = xla_tuple %s3, %s4, %s5
  %s7 = sld [smem:[#allocation0]]
  $region46: #{tpu_custom_call.1} parent=0
    _
  %s9 = ssub.s32 1, %s7
  %s10 = scalar_select 0, %s9, %s7
  $region1: #{tpu_custom_call.1} parent=0
    #allocation2 [shape = 'u8[16384]{0}', space=vmem, size = 0x4000, scoped, tag = 'input window, operand 0, single buffered']
    #allocation3 [shape = 's32[1]{0}', space=sflag, size = 0x4, scoped, tag = 'scoped memory for tpu_custom_call.1']
    #allocation4 [shape = 's32[1]{0}', space=sflag, size = 0x4, scoped, tag = 'scoped memory for tpu_custom_call.1']
    #allocation5 [shape = 'u8[8192]{0}', space=vmem, size = 0x2000, scoped, tag = 'input window, operand 1, single buffered']
    #allocation6 [shape = 's32[1]{0}', space=sflag, size = 0x4, scoped, tag = 'scoped memory for tpu_custom_call.1']
    #allocation7 [shape = 'u8[8192]{0}', space=vmem, size = 0x2000, scoped, tag = 'output window, operand 0, single buffered']
    #allocation8 [shape = 'u8[8192]{0}', space=vmem, size = 0x2000, scoped, tag = 'output window, operand 1, single buffered']
    #allocation9 [shape = 's32[1]{0}', space=sflag, size = 0x4, scoped, tag = 'scoped memory for tpu_custom_call.1']
    #allocation10 [shape = 'u8[8192]{0}', space=vmem, size = 0x2000, scoped, tag = 'output window, operand 2, single buffered']
    %11 = vsyncpa [#allocation3], 0
    %12 = vsyncpa [#allocation6], 0
    %13 = vsyncpa [#allocation4], 0
    %14 = vsyncpa [#allocation9], 0
    // Predicated region
    $region2: #{tpu_custom_call.1} parent=1 // pred_check
      _
    $region3: #{tpu_custom_call.1} parent=1 // pred_check_branch
      %16 = sbr.rel (0) target = $region5
    $region4: #{tpu_custom_call.1} parent=1 // pred_region
      %s18 = ssub.s32 512, 512
      %19 = vsyncadd [#allocation3], %s18
      %s20 = sshll.u32 [#allocation2], 4
      %s21 = int_to_ptr.vmem [resolvable:$true] %s20
      %26 = dma.hbm_to_vmem [thread:$0]  %s0, 512, %s21, [#allocation3], 128, 128, 8
    $region5: #{tpu_custom_call.1} parent=1 // pred_fallthru
      _
    // Predicated region
    $region6: #{tpu_custom_call.1} parent=1 // pred_check
      _
    $region7: #{tpu_custom_call.1} parent=1 // pred_check_branch
      %28 = sbr.rel (0) target = $region9
    $region8: #{tpu_custom_call.1} parent=1 // pred_region
      %s30 = ssub.s32 256, 256
      %31 = vsyncadd [#allocation6], %s30
      %s32 = sshll.u32 [#allocation5], 4
      %s33 = int_to_ptr.vmem [resolvable:$true] %s32
      %38 = dma.hbm_to_vmem [thread:$0]  %s1, 256, %s33, [#allocation6], 64, 64, 4
    $region9: #{tpu_custom_call.1} parent=1 // pred_fallthru
      _
    // Predicated region
    $region10: #{tpu_custom_call.1} parent=1 // pred_check
      _
    $region11: #{tpu_custom_call.1} parent=1 // pred_check_branch
      %40 = sbr.rel (0) target = $region13
    $region12: #{tpu_custom_call.1} parent=1 // pred_region
      _
    $region13: #{tpu_custom_call.1} parent=1 // pred_fallthru
      _
    // Predicated region
    $region14: #{tpu_custom_call.1} parent=1 // pred_check
      _
    $region15: #{tpu_custom_call.1} parent=1 // pred_check_branch
      %42 = sbr.rel (0) target = $region17
    $region16: #{tpu_custom_call.1} parent=1 // pred_region
      %43 = dma.done [#allocation3], 512
    $region17: #{tpu_custom_call.1} parent=1 // pred_fallthru
      _
    // Predicated region
    $region18: #{tpu_custom_call.1} parent=1 // pred_check
      _
    $region19: #{tpu_custom_call.1} parent=1 // pred_check_branch
      %45 = sbr.rel (0) target = $region21
    $region20: #{tpu_custom_call.1} parent=1 // pred_region
      %46 = dma.done [#allocation6], 256
    $region21: #{tpu_custom_call.1} parent=1 // pred_fallthru
      _
    %v48 = vld [vmem:[#allocation2] sm:$0xff]
    %v49 = vld [vmem:[#allocation2 + $0x8] sm:$0xff]
    %v50 = vld [vmem:[#allocation2 + $0x10] sm:$0xff]
    %v51 = vld [vmem:[#allocation2 + $0x18] sm:$0xff]
    %v52 = vpack.c.bf16 %v49, %v48
    %v53 = vpack.c.bf16 %v51, %v50
    %v54 = vld [vmem:[#allocation5] sm:$0xf]
    %v55 = vld [vmem:[#allocation5 + $0x4] sm:$0xf]
    %v56 = vld [vmem:[#allocation5 + $0x8] sm:$0xf]
    %v57 = vld [vmem:[#allocation5 + $0xc] sm:$0xf]
    %v58 = vld [vmem:[%s2] sm:$0x1]
    %v60 = vlaneseq
    %v61 = vshrl.u32 %v60, 7
    %v62 = vsub.s32 0, %v61
    %v63 = vrot.slane %v58, %v62
    %v69 = vunpack.c.l.b16 %v54
    %v70 = vunpack.c.l.b16 %v55
    %v71 = vunpack.c.l.b16 %v56
    %v72 = vunpack.c.l.b16 %v57
    %v73 = vpack.c.b16 %v70, %v69
    %v74 = vpack.c.b16 %v72, %v71
    %vm77 = vcmask 261120
    %v79 = vsel %vm77, %v52, 0
    %v82 = vsel %vm77, %v53, 0
    %84 = vmatprep.subr.bf16.mxu0 0
    %85 = vmatpush1.bf16.msra.mxu0 %v73
    %86 = vmatprep.subr.bf16.mxu0 0
    %87 = vmatpush1.bf16.msra.mxu0 %v74
    %88 = vmatprep.subr.bf16.mxu0 0
    %89 = vmatpush1.bf16.msra.mxu0 0
    %90 = vmatprep.subr.bf16.mxu0 0
    %91 = vmatpush1.bf16.msra.mxu0 0
    %92 = vmatprep.subr.bf16.mxu0 0
    %93 = vmatpush1.bf16.msra.mxu0 0
    %94 = vmatprep.subr.bf16.mxu0 0
    %95 = vmatpush1.bf16.msra.mxu0 0
    %96 = vmatprep.subr.bf16.mxu0 0
    %97 = vmatpush1.bf16.msra.mxu0 0
    %98 = vmatprep.subr.bf16.mxu0 0
    %99 = vmatpush1.bf16.msra.mxu0 0
    %100 = vmatprep.subr.bf16.mxu0 0
    %101 = vmatpush1.bf16.msra.mxu0 0
    %102 = vmatprep.subr.bf16.mxu0 0
    %103 = vmatpush1.bf16.msra.mxu0 0
    %104 = vmatprep.subr.bf16.mxu0 0
    %105 = vmatpush1.bf16.msra.mxu0 0
    %106 = vmatprep.subr.bf16.mxu0 0
    %107 = vmatpush1.bf16.msra.mxu0 0
    %108 = vmatprep.subr.bf16.mxu0 0
    %109 = vmatpush1.bf16.msra.mxu0 0
    %110 = vmatprep.subr.bf16.mxu0 0
    %111 = vmatpush1.bf16.msra.mxu0 0
    %112 = vmatprep.subr.bf16.mxu0 0
    %113 = vmatpush1.bf16.msra.mxu0 0
    %114 = vmatprep.subr.bf16.mxu0 0
    %115 = vmatpush1.bf16.msra.mxu0 0
    %116 = vmatprep.mubr.bf16.mxu0 0
    %117 = vmatmul.mubr.bf16.gmra.mrb[0].mxu0 %v79
    %v118 = vpop.f32.mrb[0].mxu0
    %v119 = vadd.f32 %v63, %v118
    %v120 = vpop.f32.mrb[0].mxu0
    %v121 = vpop.f32.mrb[0].mxu0
    %v122 = vadd.f32 %v63, %v121
    %v123 = vpop.f32.mrb[0].mxu0
    %124 = vmatprep.mubr.bf16.mxu0 0
    %125 = vmatmul.mubr.bf16.gmra.mrb[0].mxu0 %v82
    %v126 = vpop.f32.mrb[0].mxu0
    %v127 = vadd.f32 %v63, %v126
    %v128 = vpop.f32.mrb[0].mxu0
    %v129 = vpop.f32.mrb[0].mxu0
    %v130 = vadd.f32 %v63, %v129
    %v131 = vpop.f32.mrb[0].mxu0
    %132 = vdwg.mxu0
    %v133 = vpack.c.bf16 %v122, %v119
    %v134 = vpack.c.bf16 %v130, %v127
    %v137 = vunpack.c.l.b16 %v133
    %v138 = vunpack.c.h.b16 %v133
    %v139 = vunpack.c.l.b16 %v134
    %v140 = vunpack.c.h.b16 %v134
    %v141 = vpack.c.b16 %v137, %v137
    %v142 = vpack.c.b16 %v138, %v138
    %v143 = vpack.c.b16 %v139, %v139
    %v144 = vpack.c.b16 %v140, %v140
    %vm149 = vcmask 257024
    %150 = vst.msk [vmem:[#allocation7] sm:$0xf] %vm149, %v141
    %151 = vst.msk [vmem:[#allocation7 + $0x4] sm:$0xf] %vm149, %v142
    %152 = vst.msk [vmem:[#allocation7 + $0x8] sm:$0xf] %vm149, %v143
    %153 = vst.msk [vmem:[#allocation7 + $0xc] sm:$0xf] %vm149, %v144
    %154 = vrot.lane.b32.xlu0 %v141, 96
    %v155 = vpop.permute.xlu0 %154
    %156 = vrot.lane.b32.xlu0 %v142, 96
    %v157 = vpop.permute.xlu0 %156
    %158 = vrot.lane.b32.xlu0 %v143, 96
    %v159 = vpop.permute.xlu0 %158
    %160 = vrot.lane.b32.xlu0 %v144, 96
    %v161 = vpop.permute.xlu0 %160
    %166 = vst.msk [vmem:[#allocation8] sm:$0xf] %vm149, %v155
    %167 = vst.msk [vmem:[#allocation8 + $0x4] sm:$0xf] %vm149, %v157
    %168 = vst.msk [vmem:[#allocation8 + $0x8] sm:$0xf] %vm149, %v159
    %169 = vst.msk [vmem:[#allocation8 + $0xc] sm:$0xf] %vm149, %v161
    %170 = vrot.lane.b32.xlu0 %v141, 64
    %v171 = vpop.permute.xlu0 %170
    %172 = vrot.lane.b32.xlu0 %v142, 64
    %v173 = vpop.permute.xlu0 %172
    %174 = vrot.lane.b32.xlu0 %v143, 64
    %v175 = vpop.permute.xlu0 %174
    %176 = vrot.lane.b32.xlu0 %v144, 64
    %v177 = vpop.permute.xlu0 %176
    %182 = vst.msk [vmem:[#allocation10] sm:$0xf] %vm149, %v171
    %183 = vst.msk [vmem:[#allocation10 + $0x4] sm:$0xf] %vm149, %v173
    %184 = vst.msk [vmem:[#allocation10 + $0x8] sm:$0xf] %vm149, %v175
    %185 = vst.msk [vmem:[#allocation10 + $0xc] sm:$0xf] %vm149, %v177
    // Predicated region
    $region22: #{tpu_custom_call.1} parent=1 // pred_check
      _
    $region23: #{tpu_custom_call.1} parent=1 // pred_check_branch
      %187 = sbr.rel (0) target = $region25
    $region24: #{tpu_custom_call.1} parent=1 // pred_region
      %s189 = ssub.s32 256, 256
      %190 = vsyncadd [#allocation4], %s189
      %s191 = sshll.u32 [#allocation7], 4
      %s192 = int_to_ptr.vmem [resolvable:$true] %s191
      %197 = dma.vmem_to_hbm [thread:$0]  %s192, 256, %s3, [#allocation4], 64, 64, 4
    $region25: #{tpu_custom_call.1} parent=1 // pred_fallthru
      _
    // Predicated region
    $region26: #{tpu_custom_call.1} parent=1 // pred_check
      _
    $region27: #{tpu_custom_call.1} parent=1 // pred_check_branch
      %199 = sbr.rel (0) target = $region29
    $region28: #{tpu_custom_call.1} parent=1 // pred_region
      %s201 = ssub.s32 256, 256
      %202 = vsyncadd [#allocation9], %s201
      %s203 = sshll.u32 [#allocation8], 4
      %s204 = int_to_ptr.vmem [resolvable:$true] %s203
      %209 = dma.vmem_to_hbm [thread:$0]  %s204, 256, %s4, [#allocation9], 64, 64, 4
    $region29: #{tpu_custom_call.1} parent=1 // pred_fallthru
      _
    // Predicated region
    $region30: #{tpu_custom_call.1} parent=1 // pred_check
      _
    $region31: #{tpu_custom_call.1} parent=1 // pred_check_branch
      %211 = sbr.rel (0) target = $region33
    $region32: #{tpu_custom_call.1} parent=1 // pred_region
      %s213 = ssub.s32 256, 256
      %214 = vsyncadd [#allocation9], %s213
      %s215 = sshll.u32 [#allocation10], 4
      %s216 = int_to_ptr.vmem [resolvable:$true] %s215
      %221 = dma.vmem_to_hbm [thread:$0]  %s216, 256, %s5, [#allocation9], 64, 64, 4
    $region33: #{tpu_custom_call.1} parent=1 // pred_fallthru
      _
    // Predicated region
    $region34: #{tpu_custom_call.1} parent=1 // pred_check
      _
    $region35: #{tpu_custom_call.1} parent=1 // pred_check_branch
      %223 = sbr.rel (0) target = $region37
    $region36: #{tpu_custom_call.1} parent=1 // pred_region
      %224 = dma.done [#allocation4], 256
    $region37: #{tpu_custom_call.1} parent=1 // pred_fallthru
      _
    // Predicated region
    $region38: #{tpu_custom_call.1} parent=1 // pred_check
      _
    $region39: #{tpu_custom_call.1} parent=1 // pred_check_branch
      %226 = sbr.rel (0) target = $region41
    $region40: #{tpu_custom_call.1} parent=1 // pred_region
      %227 = dma.done [#allocation9], 256
    $region41: #{tpu_custom_call.1} parent=1 // pred_fallthru
      _
    // Predicated region
    $region42: #{tpu_custom_call.1} parent=1 // pred_check
      _
    $region43: #{tpu_custom_call.1} parent=1 // pred_check_branch
      %229 = sbr.rel (0) target = $region45
    $region44: #{tpu_custom_call.1} parent=1 // pred_region
      %230 = dma.done [#allocation9], 256
    $region45: #{tpu_custom_call.1} parent=1 // pred_fallthru
      _
    %231 = vsyncpa [#allocation3], 1
    %232 = vsyncpa [#allocation6], 1
    %233 = vsyncpa [#allocation4], 1
    %234 = vsyncpa [#allocation9], 1

</llo_original>
